<compile_context>
chip_gen: v6e
topology: v6e:2x2x1
jax: 0.10.0
libtpu: 0.0.40
codegen_flags: <defaults>
</compile_context>

<pallas_src>
import jax
import jax.numpy as jnp
from jax.experimental import pallas as pl
from jax.experimental.pallas import tpu as pltpu


MAX_TILE_B = 512   # large tiles amortize the ~0.35 us/step grid overhead


def _round_up(n, m):
    return ((n + m - 1) // m) * m


def _choose_tile_b(B):
    """Largest batch tile <= MAX_TILE_B that still leaves >= 2 grid steps
    (keeps both v7x TensorCores busy), rounded up to a sublane multiple of 8."""
    if B <= 8:
        return 8
    half = -(-B // 2)                      # cdiv(B, 2)
    return min(MAX_TILE_B, _round_up(half, 8))


def _ode_kernel(x_ref, w1_ref, bias1_ref, w2_ref, b2_ref, o_ref):
    # Cast x to bf16 on the VPU so the MXU sees bf16 operands, f32 accumulation.
    x = x_ref[...].astype(w1_ref.dtype)
    h = jnp.dot(x, w1_ref[...], preferred_element_type=jnp.float32)
    # Pre-folded time-conditioned bias (t*wt + b1); tanh in f32 on the EUP.
    h = jnp.tanh(h + bias1_ref[...])
    # Cast the hidden activation to bf16 only where it feeds the MXU.
    out = jnp.dot(h.astype(w2_ref.dtype), w2_ref[...],
                  preferred_element_type=jnp.float32)
    o_ref[...] = (out + b2_ref[...]).astype(o_ref.dtype)


def prepare_ode_params(params):
    """One-time (per-model) prep: bf16 MXU weights, f32 biases.
    Hoisted out of the per-timestep forward so ODE solvers do not repeat it."""
    w1, wt, b1, w2, b2 = params
    return (w1.astype(jnp.bfloat16),
            wt.astype(jnp.float32),
            b1.astype(jnp.float32),
            w2.astype(jnp.bfloat16),
            b2.astype(jnp.float32))


def wrap_ode_forward(t, x, prepared):
    """Pallas implementation of wrap_ode.forward(t, x) with the MLP ode."""
    w1, wt, b1, w2, b2 = prepared
    B, D = x.shape
    H = w1.shape[1]

    tile_b = _choose_tile_b(B)
    grid_b = pl.cdiv(B, tile_b)

    # Fold the time conditioning into a single (1, H) f32 bias vector.
    bias1 = jnp.asarray(t, jnp.float32) * wt + b1

    out_dtype = x.dtype
    itemsize = lambda dt: jnp.dtype(dt).itemsize
    cost = pl.CostEstimate(
        flops=4 * B * D * H,                       # two (B,D)x(D,H)-class matmuls
        transcendentals=B * H,                     # tanh
        bytes_accessed=(B * D * itemsize(x.dtype)          # x read
                        + B * D * itemsize(out_dtype)      # out write
                        + D * H * itemsize(w1.dtype)       # W1
                        + H * D * itemsize(w2.dtype)       # W2
                        + (H + D) * 4),                    # biases (f32)
    )

    return pl.pallas_call(
        _ode_kernel,
        out_shape=jax.ShapeDtypeStruct((B, D), out_dtype),
        grid=(grid_b,),
        in_specs=[
            pl.BlockSpec((tile_b, D), lambda i: (i, 0)),   # x tile (pipelined)
            pl.BlockSpec((D, H), lambda i: (0, 0)),        # W1 (VMEM-resident)
            pl.BlockSpec((1, H), lambda i: (0, 0)),        # t*wt + b1
            pl.BlockSpec((H, D), lambda i: (0, 0)),        # W2 (VMEM-resident)
            pl.BlockSpec((1, D), lambda i: (0, 0)),        # b2
        ],
        out_specs=pl.BlockSpec((tile_b, D), lambda i: (i, 0)),
        compiler_params=pltpu.CompilerParams(
            dimension_semantics=("parallel",),
        ),
        cost_estimate=cost,
    )(x, w1, bias1, w2, b2)


def init_params(key, d_in, d_hidden):
    k1, k2, k3 = jax.random.split(key, 3)
    scale1 = 1.0 / jnp.sqrt(d_in)
    scale2 = 1.0 / jnp.sqrt(d_hidden)
    w1 = jax.random.normal(k1, (d_in, d_hidden), jnp.float32) * scale1
    wt = jax.random.normal(k2, (1, d_hidden), jnp.float32) * scale1
    b1 = jnp.zeros((1, d_hidden), jnp.float32)
    w2 = jax.random.normal(k3, (d_hidden, d_in), jnp.float32) * scale2
    b2 = jnp.zeros((1, d_in), jnp.float32)
    return (w1, wt, b1, w2, b2)


def _reference_bf16(t, x, params):
    # Mirrors the kernel numerics: bf16 MXU operands, f32 accumulation, f32 tanh.
    w1, wt, b1, w2, b2 = params
    h = jnp.dot(x.astype(jnp.bfloat16), w1.astype(jnp.bfloat16),
                preferred_element_type=jnp.float32)
    h = jnp.tanh(h + jnp.float32(t) * wt + b1)
    out = jnp.dot(h.astype(jnp.bfloat16), w2.astype(jnp.bfloat16),
                  preferred_element_type=jnp.float32)
    return out + b2


def _reference_f32(t, x, params):
    w1, wt, b1, w2, b2 = params
    h = jnp.tanh(x @ w1 + jnp.float32(t) * wt + b1)
    return h @ w2 + b2


if __name__ == "__main__":
    key = jax.random.PRNGKey(0)
    kx, kp = jax.random.split(key)

    # Small shapes; B is deliberately not a multiple of the chosen tile (104),
    # so the partial-final-block (masked-store) path is exercised and the grid
    # has exactly 2 "parallel" steps.
    B, D, H = 200, 32, 64
    x = jax.random.normal(kx, (B, D), jnp.float32)
    t = 0.5
    params = init_params(kp, D, H)
    prepared = prepare_ode_params(params)

    fwd = jax.jit(wrap_ode_forward)
    out = jax.block_until_ready(fwd(t, x, prepared))
    assert out.shape == (B, D) and out.dtype == x.dtype

    # Tight check against a reference with identical bf16/f32 numerics.
    ref = _reference_bf16(t, x, params)
    assert jnp.allclose(out, ref, atol=1e-2, rtol=1e-2), float(jnp.max(jnp.abs(out - ref)))

    # Loose check against pure-f32 math (bf16 MXU operands introduce ~0.4% error).
    ref32 = _reference_f32(t, x, params)
    assert jnp.allclose(out, ref32, atol=5e-2, rtol=5e-2)

    # bf16 state path: output is written in x.dtype, so writeback is bf16 here.
    x16 = x.astype(jnp.bfloat16)
    out16 = jax.block_until_ready(fwd(t, x16, prepared))
    assert out16.shape == (B, D) and out16.dtype == jnp.bfloat16
    assert jnp.allclose(out16.astype(jnp.float32), ref, atol=5e-2, rtol=5e-2)

    print("KERNEL_OK")
</pallas_src>

<mosaic_0001>
module attributes {stable_mosaic.version = 11 : i64} {
  func.func @_ode_kernel(%arg0: i32, %arg1: memref<104x32xf32, #tpu.memory_space<vmem>>, %arg2: memref<32x64xbf16, #tpu.memory_space<vmem>>, %arg3: memref<1x64xf32, #tpu.memory_space<vmem>>, %arg4: memref<64x32xbf16, #tpu.memory_space<vmem>>, %arg5: memref<1x32xf32, #tpu.memory_space<vmem>>, %arg6: memref<104x32xf32, #tpu.memory_space<vmem>>) attributes {dimension_semantics = [#tpu.dimension_semantics<parallel>], iteration_bounds = array<i64: 2>, scalar_prefetch = 0 : i64, scratch_operands = 0 : i64, tpu.core_type = #tpu.core_type<tc>, window_params = [{transform_indices = @transform_0, window_bounds = array<i64: 104, 32>}, {pipeline_mode = #tpu.pipeline_mode<synchronous>, transform_indices = @transform_1, window_bounds = array<i64: 32, 64>}, {pipeline_mode = #tpu.pipeline_mode<synchronous>, transform_indices = @transform_2, window_bounds = array<i64: 1, 64>}, {pipeline_mode = #tpu.pipeline_mode<synchronous>, transform_indices = @transform_3, window_bounds = array<i64: 64, 32>}, {pipeline_mode = #tpu.pipeline_mode<synchronous>, transform_indices = @transform_4, window_bounds = array<i64: 1, 32>}, {transform_indices = @transform_5, window_bounds = array<i64: 104, 32>}]} {
    %c0 = arith.constant 0 : index
    %c0_0 = arith.constant 0 : index
    %0 = vector.load %arg1[%c0, %c0_0] : memref<104x32xf32, #tpu.memory_space<vmem>>, vector<104x32xf32>
    %1 = arith.truncf %0 : vector<104x32xf32> to vector<104x32xbf16>
    %c0_1 = arith.constant 0 : index
    %c0_2 = arith.constant 0 : index
    %2 = vector.load %arg2[%c0_1, %c0_2] : memref<32x64xbf16, #tpu.memory_space<vmem>>, vector<32x64xbf16>
    %cst = arith.constant dense<0.000000e+00> : vector<104x64xf32>
    %3 = tpu.matmul %1, %2, %cst {dimension_numbers = #tpu.dot_dimension_numbers<[1], [0], [0], [1], [0, 0, 1, 1], [], []>} : vector<104x32xbf16>, vector<32x64xbf16>, vector<104x64xf32> -> vector<104x64xf32>
    %c0_3 = arith.constant 0 : index
    %c0_4 = arith.constant 0 : index
    %4 = vector.load %arg3[%c0_3, %c0_4] : memref<1x64xf32, #tpu.memory_space<vmem>>, vector<1x64xf32>
    %5 = vector.broadcast %4 : vector<1x64xf32> to vector<104x64xf32>
    %6 = arith.addf %3, %5 : vector<104x64xf32>
    %7 = math.tanh %6 : vector<104x64xf32>
    %8 = arith.truncf %7 : vector<104x64xf32> to vector<104x64xbf16>
    %c0_5 = arith.constant 0 : index
    %c0_6 = arith.constant 0 : index
    %9 = vector.load %arg4[%c0_5, %c0_6] : memref<64x32xbf16, #tpu.memory_space<vmem>>, vector<64x32xbf16>
    %cst_7 = arith.constant dense<0.000000e+00> : vector<104x32xf32>
    %10 = tpu.matmul %8, %9, %cst_7 {dimension_numbers = #tpu.dot_dimension_numbers<[1], [0], [0], [1], [0, 0, 1, 1], [], []>} : vector<104x64xbf16>, vector<64x32xbf16>, vector<104x32xf32> -> vector<104x32xf32>
    %c0_8 = arith.constant 0 : index
    %c0_9 = arith.constant 0 : index
    %11 = vector.load %arg5[%c0_8, %c0_9] : memref<1x32xf32, #tpu.memory_space<vmem>>, vector<1x32xf32>
    %12 = vector.broadcast %11 : vector<1x32xf32> to vector<104x32xf32>
    %13 = arith.addf %10, %12 : vector<104x32xf32>
    %c0_10 = arith.constant 0 : index
    %c0_11 = arith.constant 0 : index
    %14 = vector.load %arg6[%c0_10, %c0_11] : memref<104x32xf32, #tpu.memory_space<vmem>>, vector<104x32xf32>
    tpu.vector_store %arg6[%c0_10, %c0_11], %13 {strides = array<i32>} : memref<104x32xf32, #tpu.memory_space<vmem>>, vector<104x32xf32>,
    return
  }
  func.func @transform_0(%arg0: i32) -> (i32, i32) {
    %c0_i32 = arith.constant 0 : i32
    %c0_i32_0 = arith.constant 0 : i32
    return %arg0, %c0_i32 : i32, i32
  }
  func.func @transform_1(%arg0: i32) -> (i32, i32) {
    %c0_i32 = arith.constant 0 : i32
    %c0_i32_0 = arith.constant 0 : i32
    %c0_i32_1 = arith.constant 0 : i32
    return %c0_i32, %c0_i32_0 : i32, i32
  }
  func.func @transform_2(%arg0: i32) -> (i32, i32) {
    %c0_i32 = arith.constant 0 : i32
    %c0_i32_0 = arith.constant 0 : i32
    %c0_i32_1 = arith.constant 0 : i32
    return %c0_i32, %c0_i32_0 : i32, i32
  }
  func.func @transform_3(%arg0: i32) -> (i32, i32) {
    %c0_i32 = arith.constant 0 : i32
    %c0_i32_0 = arith.constant 0 : i32
    %c0_i32_1 = arith.constant 0 : i32
    return %c0_i32, %c0_i32_0 : i32, i32
  }
  func.func @transform_4(%arg0: i32) -> (i32, i32) {
    %c0_i32 = arith.constant 0 : i32
    %c0_i32_0 = arith.constant 0 : i32
    %c0_i32_1 = arith.constant 0 : i32
    return %c0_i32, %c0_i32_0 : i32, i32
  }
  func.func @transform_5(%arg0: i32) -> (i32, i32) {
    %c0_i32 = arith.constant 0 : i32
    %c0_i32_0 = arith.constant 0 : i32
    return %arg0, %c0_i32 : i32, i32
  }
}

</mosaic_0001>

<llo_original>
// kernel: wrap_ode_forward.1
$region0: #{wrap_ode_forward.1}
  #allocation0 [shape = 'u32[]', space=smem, size = 0x4, offset = 0x4, fixed_abs, tag = 'smem constant byte address 0x4 - core index']
  #allocation1 [shape = 'u32[144,128]{1,0:T(1,128)}', space=vmem, size = 0x12000, scoped, tag = 'internal scratch']
  %s0 = inlined_call_operand.vmem [shape: f32[200,32], index: 0, kind: input, shape index: {}]
  %s1 = inlined_call_operand.vmem [shape: bf16[32,64], index: 1, kind: input, shape index: {}]
  %s2 = inlined_call_operand.vmem [shape: f32[1,64], index: 2, kind: input, shape index: {}]
  %s3 = inlined_call_operand.vmem [shape: bf16[64,32], index: 3, kind: input, shape index: {}]
  %s4 = inlined_call_operand.vmem [shape: f32[1,32], index: 4, kind: input, shape index: {}]
  %s5 = inlined_call_operand.vmem [shape: f32[200,32], index: 5, kind: output, shape index: {}]
  %s6 = sld [smem:[#allocation0]]
  $region101: #{wrap_ode_forward.1} parent=0
    _
  %s8 = ssub.s32 1, %s6
  %s9 = scalar_select 0, %s8, %s6
  $region1: #{wrap_ode_forward.1} parent=0
    #allocation2 [shape = 'u8[106496]{0}', space=vmem, size = 0x1a000, scoped, tag = 'output window, operand 0']
    loop: start=0, step=1, limit=4
    $region2: #{wrap_ode_forward.1} parent=1 // loop_pre_header
      _
    $region3: #{wrap_ode_forward.1} parent=1 // loop_header
      %s11 = sphi 0, %s15
      %p12 = scmp.ge.s32.totalorder %s11, 4
      %s21 = sphi 0, %s23
      %s24 = sphi 0, %s21
      %s25 = sphi 0, %s24
      %s41 = sphi 0, %s25
      %s45 = sphi 0, %s45
      %s47 = sphi 0, %s45
      %s48 = sphi 0, %s47
      %s62 = sphi 0, %s48
      %s66 = sphi 0, %s66
      %s68 = sphi 0, %s66
      %s69 = sphi 0, %s68
      %s83 = sphi 0, %s69
      %s87 = sphi 0, %s87
      %s89 = sphi 0, %s87
      %s90 = sphi 0, %s89
      %s104 = sphi 0, %s90
      %s108 = sphi 0, %s108
      %s110 = sphi 0, %s108
      %s111 = sphi 0, %s110
      %s125 = sphi 0, %s111
      %s131 = sphi 0, %s133
      %s134 = sphi 0, %s131
      %s135 = sphi 0, %s134
      %s151 = sphi 0, %s135
    $region4: #{wrap_ode_forward.1} parent=1 // loop_header_branch
      %14 = sbr.rel (%p12) target = $region8
    $region5: #{wrap_ode_forward.1} parent=1 // loop_body
      %s16 = ssub.s32 %s11, 1
      %s17 = ssub.s32 %s11, 2
      %s18 = sadd.s32 %s11, 1
      %s19 = ssub.s32 %s11, %s18
      %p20 = scmp.eq.s32.totalorder %s19, 0
      %s22 = sadd.s32 %s21, 1
      %s23 = scalar_select %p20, %s21, %s22
      %p26 = pneg %p20
      %p27 = scmp.eq.s32.totalorder %s11, 1
      %p28 = por %p26, %p27
      %p29 = scmp.ne.s32.totalorder %s21, %s24
      %p30 = scmp.eq.s32.totalorder %s11, 0
      %p31 = por %p29, %p30
      %p32 = scmp.ne.s32.totalorder %s21, %s24
      %p33 = scmp.eq.s32.totalorder %s16, 1
      %p34 = por %p32, %p33
      %p35 = scmp.ne.s32.totalorder %s24, %s25
      %p36 = scmp.eq.s32.totalorder %s16, 0
      %p37 = por %p35, %p36
      %p38 = scmp.ne.s32.totalorder %s24, %s25
      %p39 = scmp.eq.s32.totalorder %s17, 1
      %p40 = por %p38, %p39
      %p42 = scmp.ne.s32.totalorder %s25, %s41
      %p43 = scmp.eq.s32.totalorder %s17, 0
      %p44 = por %p42, %p43
      %s46 = sadd.s32 %s45, 1
      %p49 = scmp.eq.s32.totalorder %s11, 1
      %p50 = scmp.ne.s32.totalorder %s45, %s47
      %p51 = scmp.eq.s32.totalorder %s11, 0
      %p52 = por %p50, %p51
      %p53 = scmp.ne.s32.totalorder %s45, %s47
      %p54 = scmp.eq.s32.totalorder %s16, 1
      %p55 = por %p53, %p54
      %p56 = scmp.ne.s32.totalorder %s47, %s48
      %p57 = scmp.eq.s32.totalorder %s16, 0
      %p58 = por %p56, %p57
      %p59 = scmp.ne.s32.totalorder %s47, %s48
      %p60 = scmp.eq.s32.totalorder %s17, 1
      %p61 = por %p59, %p60
      %p63 = scmp.ne.s32.totalorder %s48, %s62
      %p64 = scmp.eq.s32.totalorder %s17, 0
      %p65 = por %p63, %p64
      %s67 = sadd.s32 %s66, 1
      %p70 = scmp.eq.s32.totalorder %s11, 1
      %p71 = scmp.ne.s32.totalorder %s66, %s68
      %p72 = scmp.eq.s32.totalorder %s11, 0
      %p73 = por %p71, %p72
      %p74 = scmp.ne.s32.totalorder %s66, %s68
      %p75 = scmp.eq.s32.totalorder %s16, 1
      %p76 = por %p74, %p75
      %p77 = scmp.ne.s32.totalorder %s68, %s69
      %p78 = scmp.eq.s32.totalorder %s16, 0
      %p79 = por %p77, %p78
      %p80 = scmp.ne.s32.totalorder %s68, %s69
      %p81 = scmp.eq.s32.totalorder %s17, 1
      %p82 = por %p80, %p81
      %p84 = scmp.ne.s32.totalorder %s69, %s83
      %p85 = scmp.eq.s32.totalorder %s17, 0
      %p86 = por %p84, %p85
      %s88 = sadd.s32 %s87, 1
      %p91 = scmp.eq.s32.totalorder %s11, 1
      %p92 = scmp.ne.s32.totalorder %s87, %s89
      %p93 = scmp.eq.s32.totalorder %s11, 0
      %p94 = por %p92, %p93
      %p95 = scmp.ne.s32.totalorder %s87, %s89
      %p96 = scmp.eq.s32.totalorder %s16, 1
      %p97 = por %p95, %p96
      %p98 = scmp.ne.s32.totalorder %s89, %s90
      %p99 = scmp.eq.s32.totalorder %s16, 0
      %p100 = por %p98, %p99
      %p101 = scmp.ne.s32.totalorder %s89, %s90
      %p102 = scmp.eq.s32.totalorder %s17, 1
      %p103 = por %p101, %p102
      %p105 = scmp.ne.s32.totalorder %s90, %s104
      %p106 = scmp.eq.s32.totalorder %s17, 0
      %p107 = por %p105, %p106
      %s109 = sadd.s32 %s108, 1
      %p112 = scmp.eq.s32.totalorder %s11, 1
      %p113 = scmp.ne.s32.totalorder %s108, %s110
      %p114 = scmp.eq.s32.totalorder %s11, 0
      %p115 = por %p113, %p114
      %p116 = scmp.ne.s32.totalorder %s108, %s110
      %p117 = scmp.eq.s32.totalorder %s16, 1
      %p118 = por %p116, %p117
      %p119 = scmp.ne.s32.totalorder %s110, %s111
      %p120 = scmp.eq.s32.totalorder %s16, 0
      %p121 = por %p119, %p120
      %p122 = scmp.ne.s32.totalorder %s110, %s111
      %p123 = scmp.eq.s32.totalorder %s17, 1
      %p124 = por %p122, %p123
      %p126 = scmp.ne.s32.totalorder %s111, %s125
      %p127 = scmp.eq.s32.totalorder %s17, 0
      %p128 = por %p126, %p127
      %s129 = ssub.s32 %s11, %s18
      %p130 = scmp.eq.s32.totalorder %s129, 0
      %s132 = sadd.s32 %s131, 1
      %s133 = scalar_select %p130, %s131, %s132
      %p136 = pneg %p130
      %p137 = scmp.eq.s32.totalorder %s11, 1
      %p138 = por %p136, %p137
      %p139 = scmp.ne.s32.totalorder %s131, %s134
      %p140 = scmp.eq.s32.totalorder %s11, 0
      %p141 = por %p139, %p140
      %p142 = scmp.ne.s32.totalorder %s131, %s134
      %p143 = scmp.eq.s32.totalorder %s16, 1
      %p144 = por %p142, %p143
      %p145 = scmp.ne.s32.totalorder %s134, %s135
      %p146 = scmp.eq.s32.totalorder %s16, 0
      %p147 = por %p145, %p146
      %p148 = scmp.ne.s32.totalorder %s134, %s135
      %p149 = scmp.eq.s32.totalorder %s17, 1
      %p150 = por %p148, %p149
      %p152 = scmp.ne.s32.totalorder %s135, %s151
      %p153 = scmp.eq.s32.totalorder %s17, 0
      %p154 = por %p152, %p153
      %p155 = scmp.le.s32.totalorder 1, %s11
      %p156 = scmp.lt.s32.totalorder %s11, 3
      %p157 = pnand %p155, %p156
      %p158 = pneg %p157
      // Predicated region
      $region9: #{wrap_ode_forward.1} parent=5 // pred_check
        _
      $region10: #{wrap_ode_forward.1} parent=5 // pred_check_branch
        %160 = sbr.rel (%p157) target = $region12
      $region11: #{wrap_ode_forward.1} parent=5 // pred_region
        %s161 = ssub.s32 %s11, 1
        // Predicated region
        $region13: #{wrap_ode_forward.1} parent=11 // pred_check
          %p162 = pneg %p58
        $region14: #{wrap_ode_forward.1} parent=11 // pred_check_branch
          %164 = sbr.rel (%p162) target = $region16
        $region15: #{wrap_ode_forward.1} parent=11 // pred_region
          _
        $region16: #{wrap_ode_forward.1} parent=11 // pred_fallthru
          _
        // Predicated region
        $region17: #{wrap_ode_forward.1} parent=11 // pred_check
          %p165 = pneg %p79
        $region18: #{wrap_ode_forward.1} parent=11 // pred_check_branch
          %167 = sbr.rel (%p165) target = $region20
        $region19: #{wrap_ode_forward.1} parent=11 // pred_region
          _
        $region20: #{wrap_ode_forward.1} parent=11 // pred_fallthru
          _
        // Predicated region
        $region21: #{wrap_ode_forward.1} parent=11 // pred_check
          %p168 = pneg %p100
        $region22: #{wrap_ode_forward.1} parent=11 // pred_check_branch
          %170 = sbr.rel (%p168) target = $region24
        $region23: #{wrap_ode_forward.1} parent=11 // pred_region
          _
        $region24: #{wrap_ode_forward.1} parent=11 // pred_fallthru
          _
        // Predicated region
        $region25: #{wrap_ode_forward.1} parent=11 // pred_check
          %p171 = pneg %p121
        $region26: #{wrap_ode_forward.1} parent=11 // pred_check_branch
          %173 = sbr.rel (%p171) target = $region28
        $region27: #{wrap_ode_forward.1} parent=11 // pred_region
          _
        $region28: #{wrap_ode_forward.1} parent=11 // pred_fallthru
          _
      $region12: #{wrap_ode_forward.1} parent=5 // pred_fallthru
        _
      %p174 = scmp.lt.s32.totalorder %s11, 2
      // Predicated region
      $region29: #{wrap_ode_forward.1} parent=5 // pred_check
        %p175 = pneg %p174
      $region30: #{wrap_ode_forward.1} parent=5 // pred_check_branch
        %177 = sbr.rel (%p175) target = $region32
      $region31: #{wrap_ode_forward.1} parent=5 // pred_region
        // Predicated region
        $region33: #{wrap_ode_forward.1} parent=31 // pred_check
          %p178 = pneg %p31
        $region34: #{wrap_ode_forward.1} parent=31 // pred_check_branch
          %180 = sbr.rel (%p178) target = $region36
        $region35: #{wrap_ode_forward.1} parent=31 // pred_region
          %s181 = smul.u32 13, %s11
          %s182 = ssub.s32 25, %s181
          %p183 = scmp.lt.s32.totalorder %s182, 13
          %s184 = scalar_select %p183, %s182, 13
          %s185 = smul.u32 128, %s184
          %p186 = scmp.lt.s32.totalorder %s181, 24
          %s187 = scalar_select %p186, %s181, 24
          %s188 = smul.addr %s187, 8
          %s189 = scalar_lea.vmem %s0, %s188
          %s190 = smul.u32 13, %s11
          %s191 = ssub.s32 25, %s190
          %p192 = scmp.lt.s32.totalorder %s191, 13
          %s193 = scalar_select %p192, %s191, 13
          %s194 = smul.u32 128, %s193
        $region36: #{wrap_ode_forward.1} parent=31 // pred_fallthru
          _
      $region32: #{wrap_ode_forward.1} parent=5 // pred_fallthru
        _
      %p195 = scmp.le.s32.totalorder 1, %s11
      %p196 = scmp.lt.s32.totalorder %s11, 3
      %p197 = pnand %p195, %p196
      %p198 = pneg %p197
      // Predicated region
      $region37: #{wrap_ode_forward.1} parent=5 // pred_check
        _
      $region38: #{wrap_ode_forward.1} parent=5 // pred_check_branch
        %200 = sbr.rel (%p197) target = $region40
      $region39: #{wrap_ode_forward.1} parent=5 // pred_region
        %s201 = ssub.s32 %s11, 1
        %s202 = smul.u32 13, %s16
        %s203 = ssub.s32 25, %s202
        %p204 = scmp.lt.s32.totalorder %s203, 13
        %s205 = scalar_select %p204, %s203, 13
        %s206 = smul.u32 128, %s205
        %p207 = scmp.lt.s32.totalorder %s202, 24
        %s208 = scalar_select %p207, %s202, 24
        %s209 = smul.addr %s208, 8
        %s210 = scalar_lea.vmem %s0, %s209
        %p211 = pneg %p37
        %p212 = pneg %p34
        %p213 = pneg %p58
        %p214 = pneg %p55
        %p215 = pneg %p79
        %p216 = pneg %p76
        %p217 = pneg %p100
        %p218 = pneg %p97
        %p219 = pneg %p121
        %p220 = pneg %p118
        %p221 = pneg %p147
        %p222 = pneg %p144
        %s223 = sand.u32 %s134, 1
        %s224 = sand.u32 %s134, 1
        %s225 = smul.addr %s224, 104
        %s226 = scalar_lea.vmem [#allocation2], %s225
        %s227 = smul.u32 13, %s16
        %s228 = ssub.s32 25, %s227
        %p229 = scmp.lt.s32.totalorder %s228, 13
        %s230 = scalar_select %p229, %s228, 13
        %s231 = smul.u32 128, %s230
        %p232 = scmp.lt.s32.totalorder %s227, 24
        %s233 = scalar_select %p232, %s227, 24
        %s234 = smul.addr %s233, 8
        %s235 = scalar_lea.vmem %s0, %s234
        %s236 = smul.u32 13, %s16
        %s237 = ssub.s32 25, %s236
        %p238 = scmp.lt.s32.totalorder %s237, 13
        %s239 = scalar_select %p238, %s237, 13
        %s240 = smul.u32 128, %s239
        %s241 = smul.u32 13, %s16
        %s242 = ssub.s32 25, %s241
        %p243 = scmp.lt.s32.totalorder %s242, 13
        %s244 = scalar_select %p243, %s242, 13
        %s245 = smul.u32 128, %s244
        %v247 = vld [vmem:[%s235] sm:$0xff]
        %v248 = vld [vmem:[%s235 + $0x8] sm:$0xff]
        %v249 = vld [vmem:[%s235 + $0x10] sm:$0xff]
        %v250 = vld [vmem:[%s235 + $0x18] sm:$0xff]
        %v251 = vld [vmem:[%s235 + $0x20] sm:$0xff]
        %v252 = vld [vmem:[%s235 + $0x28] sm:$0xff]
        %v253 = vld [vmem:[%s235 + $0x30] sm:$0xff]
        %v254 = vld [vmem:[%s235 + $0x38] sm:$0xff]
        %v255 = vld [vmem:[%s235 + $0x40] sm:$0xff]
        %v256 = vld [vmem:[%s235 + $0x48] sm:$0xff]
        %v257 = vld [vmem:[%s235 + $0x50] sm:$0xff]
        %v258 = vld [vmem:[%s235 + $0x58] sm:$0xff]
        %v259 = vld [vmem:[%s235 + $0x60] sm:$0xff]
        %v260 = vpack.c.bf16 %v248, %v247
        %v261 = vpack.c.bf16 %v250, %v249
        %v262 = vpack.c.bf16 %v252, %v251
        %v263 = vpack.c.bf16 %v254, %v253
        %v264 = vpack.c.bf16 %v256, %v255
        %v265 = vpack.c.bf16 %v258, %v257
        %v266 = vpack.c.bf16 %v259, %v259
        %v267 = vld [vmem:[%s1] sm:$0xf]
        %v268 = vld [vmem:[%s1 + $0x4] sm:$0xf]
        %v269 = vld [vmem:[%s1 + $0x8] sm:$0xf]
        %v270 = vld [vmem:[%s1 + $0xc] sm:$0xf]
        %v271 = vld [vmem:[%s2] sm:$0x1]
        %v273 = vlaneseq
        %v274 = vshrl.u32 %v273, 7
        %v275 = vsub.s32 0, %v274
        %v276 = vrot.slane %v271, %v275
        %v282 = vunpack.c.l.b16 %v267
        %v283 = vunpack.c.l.b16 %v268
        %v284 = vunpack.c.l.b16 %v269
        %v285 = vunpack.c.l.b16 %v270
        %v286 = vpack.c.b16 %v283, %v282
        %v287 = vpack.c.b16 %v285, %v284
        %vm290 = vcmask 261120
        %v292 = vsel %vm290, %v260, 0
        %v295 = vsel %vm290, %v261, 0
        %v298 = vsel %vm290, %v262, 0
        %v301 = vsel %vm290, %v263, 0
        %v304 = vsel %vm290, %v264, 0
        %v307 = vsel %vm290, %v265, 0
        %v310 = vsel %vm290, %v266, 0
        %312 = vmatprep.subr.bf16.mxu0 0
        %313 = vmatpush1.bf16.msra.mxu0 0
        %314 = vmatprep.subr.bf16.mxu0 0
        %315 = vmatpush1.bf16.msra.mxu0 0
        %316 = vmatprep.subr.bf16.mxu0 0
        %317 = vmatpush1.bf16.msra.mxu0 0
        %318 = vmatprep.subr.bf16.mxu0 0
        %319 = vmatpush1.bf16.msra.mxu0 0
        %320 = vmatprep.subr.bf16.mxu0 0
        %321 = vmatpush1.bf16.msra.mxu0 0
        %322 = vmatprep.subr.bf16.mxu0 0
        %323 = vmatpush1.bf16.msra.mxu0 0
        %324 = vmatprep.subr.bf16.mxu0 0
        %325 = vmatpush1.bf16.msra.mxu0 %v287
        %326 = vmatprep.subr.bf16.mxu0 0
        %327 = vmatpush1.bf16.msra.mxu0 %v286
        %328 = vmatprep.subr.bf16.mxu0 0
        %329 = vmatpush2.bf16.msra.mxu0 0
        %330 = vmatprep.subr.bf16.mxu0 0
        %331 = vmatpush2.bf16.msra.mxu0 0
        %332 = vmatprep.subr.bf16.mxu0 0
        %333 = vmatpush2.bf16.msra.mxu0 0
        %334 = vmatprep.subr.bf16.mxu0 0
        %335 = vmatpush2.bf16.msra.mxu0 0
        %336 = vmatprep.subr.bf16.mxu0 0
        %337 = vmatpush2.bf16.msra.mxu0 0
        %338 = vmatprep.subr.bf16.mxu0 0
        %339 = vmatpush2.bf16.msra.mxu0 0
        %340 = vmatprep.subr.bf16.mxu0 0
        %341 = vmatpush2.bf16.msra.mxu0 0
        %342 = vmatprep.subr.bf16.mxu0 0
        %343 = vmatpush2.bf16.msra.mxu0 0
        %344 = vmatprep.mubr.bf16.mxu0 0
        %345 = vmatmul.mubr.bf16.gmra.mxu0 %v292
        %v346 = vpop.f32.mrf.mxu0
        %v347 = vadd.f32 %v276, %v346
        %v348 = vpop.f32.mrf.mxu0
        %v349 = vpop.f32.mrf.mxu0
        %v350 = vadd.f32 %v276, %v349
        %v351 = vpop.f32.mrf.mxu0
        %352 = vmatprep.mubr.bf16.mxu0 0
        %353 = vmatmul.mubr.bf16.gmra.mxu0 %v295
        %v354 = vpop.f32.mrf.mxu0
        %v355 = vadd.f32 %v276, %v354
        %v356 = vpop.f32.mrf.mxu0
        %v357 = vpop.f32.mrf.mxu0
        %v358 = vadd.f32 %v276, %v357
        %v359 = vpop.f32.mrf.mxu0
        %360 = vmatprep.mubr.bf16.mxu0 0
        %361 = vmatmul.mubr.bf16.gmra.mxu0 %v298
        %v362 = vpop.f32.mrf.mxu0
        %v363 = vadd.f32 %v276, %v362
        %v364 = vpop.f32.mrf.mxu0
        %v365 = vpop.f32.mrf.mxu0
        %v366 = vadd.f32 %v276, %v365
        %v367 = vpop.f32.mrf.mxu0
        %368 = vmatprep.mubr.bf16.mxu0 0
        %369 = vmatmul.mubr.bf16.gmra.mxu0 %v301
        %v370 = vpop.f32.mrf.mxu0
        %v371 = vadd.f32 %v276, %v370
        %v372 = vpop.f32.mrf.mxu0
        %v373 = vpop.f32.mrf.mxu0
        %v374 = vadd.f32 %v276, %v373
        %v375 = vpop.f32.mrf.mxu0
        %376 = vmatprep.mubr.bf16.mxu0 0
        %377 = vmatmul.mubr.bf16.gmra.mxu0 %v304
        %v378 = vpop.f32.mrf.mxu0
        %v379 = vadd.f32 %v276, %v378
        %v380 = vpop.f32.mrf.mxu0
        %v381 = vpop.f32.mrf.mxu0
        %v382 = vadd.f32 %v276, %v381
        %v383 = vpop.f32.mrf.mxu0
        %384 = vmatprep.mubr.bf16.mxu0 0
        %385 = vmatmul.mubr.bf16.gmra.mxu0 %v307
        %v386 = vpop.f32.mrf.mxu0
        %v387 = vadd.f32 %v276, %v386
        %v388 = vpop.f32.mrf.mxu0
        %v389 = vpop.f32.mrf.mxu0
        %v390 = vadd.f32 %v276, %v389
        %v391 = vpop.f32.mrf.mxu0
        %392 = vmatprep.mubr.bf16.mxu0 0
        %393 = vmatmul.mubr.bf16.gmra.mxu0 %v310
        %v394 = vpop.f32.mrf.mxu0
        %v395 = vadd.f32 %v276, %v394
        %v396 = vpop.f32.mrf.mxu0
        %v397 = vpop.f32.mrf.mxu0
        %v398 = vpop.f32.mrf.mxu0
        %399 = vdwg.mxu0
        %v400 = vtanh.pop %v347
        %v401 = vtanh.pop %v350
        %v402 = vtanh.pop %v355
        %v403 = vtanh.pop %v358
        %v404 = vtanh.pop %v363
        %v405 = vtanh.pop %v366
        %v406 = vtanh.pop %v371
        %v407 = vtanh.pop %v374
        %v408 = vtanh.pop %v379
        %v409 = vtanh.pop %v382
        %v410 = vtanh.pop %v387
        %v411 = vtanh.pop %v390
        %v412 = vtanh.pop %v395
        %v413 = vpack.c.bf16 %v401, %v400
        %v414 = vpack.c.bf16 %v403, %v402
        %v415 = vpack.c.bf16 %v405, %v404
        %v416 = vpack.c.bf16 %v407, %v406
        %v417 = vpack.c.bf16 %v409, %v408
        %v418 = vpack.c.bf16 %v411, %v410
        %v419 = vpack.c.bf16 %v412, %v412
        %v420 = vld [vmem:[%s3] sm:$0xf]
        %v421 = vld [vmem:[%s3 + $0x4] sm:$0xf]
        %v422 = vld [vmem:[%s3 + $0x8] sm:$0xf]
        %v423 = vld [vmem:[%s3 + $0xc] sm:$0xf]
        %v424 = vld [vmem:[%s3 + $0x10] sm:$0xf]
        %v425 = vld [vmem:[%s3 + $0x14] sm:$0xf]
        %v426 = vld [vmem:[%s3 + $0x18] sm:$0xf]
        %v427 = vld [vmem:[%s3 + $0x1c] sm:$0xf]
        %v428 = vld [vmem:[%s4] sm:$0x1]
        %v430 = vlaneseq
        %v431 = vshrl.u32 %v430, 7
        %v432 = vsub.s32 0, %v431
        %v433 = vrot.slane %v428, %v432
        %v443 = vunpack.c.l.b16 %v420
        %v444 = vunpack.c.l.b16 %v421
        %v445 = vunpack.c.l.b16 %v422
        %v446 = vunpack.c.l.b16 %v423
        %v447 = vunpack.c.l.b16 %v424
        %v448 = vunpack.c.l.b16 %v425
        %v449 = vunpack.c.l.b16 %v426
        %v450 = vunpack.c.l.b16 %v427
        %v451 = vpack.c.b16 %v444, %v443
        %v452 = vpack.c.b16 %v446, %v445
        %v453 = vpack.c.b16 %v448, %v447
        %v454 = vpack.c.b16 %v450, %v449
        %vm459 = vcmask 523264
        %v461 = vsel %vm459, %v413, 0
        %v464 = vsel %vm459, %v414, 0
        %v467 = vsel %vm459, %v415, 0
        %v470 = vsel %vm459, %v416, 0
        %v473 = vsel %vm459, %v417, 0
        %v476 = vsel %vm459, %v418, 0
        %v479 = vsel %vm459, %v419, 0
        %481 = vmatprep.subr.bf16.mxu0 0
        %482 = vmatpush1.bf16.msra.mxu0 0
        %483 = vmatprep.subr.bf16.mxu0 0
        %484 = vmatpush1.bf16.msra.mxu0 0
        %485 = vmatprep.subr.bf16.mxu0 0
        %486 = vmatpush1.bf16.msra.mxu0 0
        %487 = vmatprep.subr.bf16.mxu0 0
        %488 = vmatpush1.bf16.msra.mxu0 0
        %489 = vmatprep.subr.bf16.mxu0 0
        %490 = vmatpush1.bf16.msra.mxu0 %v454
        %491 = vmatprep.subr.bf16.mxu0 0
        %492 = vmatpush1.bf16.msra.mxu0 %v453
        %493 = vmatprep.subr.bf16.mxu0 0
        %494 = vmatpush1.bf16.msra.mxu0 %v452
        %495 = vmatprep.subr.bf16.mxu0 0
        %496 = vmatpush1.bf16.msra.mxu0 %v451
        %497 = vmatprep.subr.bf16.mxu0 0
        %498 = vmatpush2.bf16.msra.mxu0 0
        %499 = vmatprep.subr.bf16.mxu0 0
        %500 = vmatpush2.bf16.msra.mxu0 0
        %501 = vmatprep.subr.bf16.mxu0 0
        %502 = vmatpush2.bf16.msra.mxu0 0
        %503 = vmatprep.subr.bf16.mxu0 0
        %504 = vmatpush2.bf16.msra.mxu0 0
        %505 = vmatprep.subr.bf16.mxu0 0
        %506 = vmatpush2.bf16.msra.mxu0 0
        %507 = vmatprep.subr.bf16.mxu0 0
        %508 = vmatpush2.bf16.msra.mxu0 0
        %509 = vmatprep.subr.bf16.mxu0 0
        %510 = vmatpush2.bf16.msra.mxu0 0
        %511 = vmatprep.subr.bf16.mxu0 0
        %512 = vmatpush2.bf16.msra.mxu0 0
        %513 = vmatprep.mubr.bf16.mxu0 0
        %514 = vmatmul.mubr.bf16.gmra.mxu0 %v461
        %v515 = vpop.f32.mrf.mxu0
        %v516 = vadd.f32 %v433, %v515
        %v517 = vpop.f32.mrf.mxu0
        %v518 = vpop.f32.mrf.mxu0
        %v519 = vadd.f32 %v433, %v518
        %v520 = vpop.f32.mrf.mxu0
        %521 = vmatprep.mubr.bf16.mxu0 0
        %522 = vmatmul.mubr.bf16.gmra.mxu0 %v464
        %v523 = vpop.f32.mrf.mxu0
        %v524 = vadd.f32 %v433, %v523
        %v525 = vpop.f32.mrf.mxu0
        %v526 = vpop.f32.mrf.mxu0
        %v527 = vadd.f32 %v433, %v526
        %v528 = vpop.f32.mrf.mxu0
        %529 = vmatprep.mubr.bf16.mxu0 0
        %530 = vmatmul.mubr.bf16.gmra.mxu0 %v467
        %v531 = vpop.f32.mrf.mxu0
        %v532 = vadd.f32 %v433, %v531
        %v533 = vpop.f32.mrf.mxu0
        %v534 = vpop.f32.mrf.mxu0
        %v535 = vadd.f32 %v433, %v534
        %v536 = vpop.f32.mrf.mxu0
        %537 = vmatprep.mubr.bf16.mxu0 0
        %538 = vmatmul.mubr.bf16.gmra.mxu0 %v470
        %v539 = vpop.f32.mrf.mxu0
        %v540 = vadd.f32 %v433, %v539
        %v541 = vpop.f32.mrf.mxu0
        %v542 = vpop.f32.mrf.mxu0
        %v543 = vadd.f32 %v433, %v542
        %v544 = vpop.f32.mrf.mxu0
        %545 = vmatprep.mubr.bf16.mxu0 0
        %546 = vmatmul.mubr.bf16.gmra.mxu0 %v473
        %v547 = vpop.f32.mrf.mxu0
        %v548 = vadd.f32 %v433, %v547
        %v549 = vpop.f32.mrf.mxu0
        %v550 = vpop.f32.mrf.mxu0
        %v551 = vadd.f32 %v433, %v550
        %v552 = vpop.f32.mrf.mxu0
        %553 = vmatprep.mubr.bf16.mxu0 0
        %554 = vmatmul.mubr.bf16.gmra.mxu0 %v476
        %v555 = vpop.f32.mrf.mxu0
        %v556 = vadd.f32 %v433, %v555
        %v557 = vpop.f32.mrf.mxu0
        %v558 = vpop.f32.mrf.mxu0
        %v559 = vadd.f32 %v433, %v558
        %v560 = vpop.f32.mrf.mxu0
        %561 = vmatprep.mubr.bf16.mxu0 0
        %562 = vmatmul.mubr.bf16.gmra.mxu0 %v479
        %v563 = vpop.f32.mrf.mxu0
        %v564 = vadd.f32 %v433, %v563
        %v565 = vpop.f32.mrf.mxu0
        %v566 = vpop.f32.mrf.mxu0
        %v567 = vpop.f32.mrf.mxu0
        %568 = vdwg.mxu0
        %569 = vst.msk [vmem:[%s226] sm:$0xff] %vm290, %v516
        %570 = vst.msk [vmem:[%s226 + $0x8] sm:$0xff] %vm290, %v519
        %571 = vst.msk [vmem:[%s226 + $0x10] sm:$0xff] %vm290, %v524
        %572 = vst.msk [vmem:[%s226 + $0x18] sm:$0xff] %vm290, %v527
        %573 = vst.msk [vmem:[%s226 + $0x20] sm:$0xff] %vm290, %v532
        %574 = vst.msk [vmem:[%s226 + $0x28] sm:$0xff] %vm290, %v535
        %575 = vst.msk [vmem:[%s226 + $0x30] sm:$0xff] %vm290, %v540
        %576 = vst.msk [vmem:[%s226 + $0x38] sm:$0xff] %vm290, %v543
        %577 = vst.msk [vmem:[%s226 + $0x40] sm:$0xff] %vm290, %v548
        %578 = vst.msk [vmem:[%s226 + $0x48] sm:$0xff] %vm290, %v551
        %579 = vst.msk [vmem:[%s226 + $0x50] sm:$0xff] %vm290, %v556
        %580 = vst.msk [vmem:[%s226 + $0x58] sm:$0xff] %vm290, %v559
        %581 = vst.msk [vmem:[%s226 + $0x60] sm:$0xff] %vm290, %v564
        %s582 = sand.u32 %s134, 1
        %s583 = sand.u32 %s134, 1
        %s584 = smul.addr %s583, 104
        %s585 = scalar_lea.vmem [#allocation2], %s584
        // Predicated region
        $region41: #{wrap_ode_forward.1} parent=39 // pred_check
          %p586 = pneg %p144
        $region42: #{wrap_ode_forward.1} parent=39 // pred_check_branch
          %588 = sbr.rel (%p586) target = $region44
        $region43: #{wrap_ode_forward.1} parent=39 // pred_region
          %s589 = smul.u32 13, %s16
          %s590 = ssub.s32 25, %s589
          %p591 = scmp.lt.s32.totalorder %s590, 13
          %s592 = scalar_select %p591, %s590, 13
          %s593 = smul.u32 128, %s592
          %p594 = scmp.ne.s32.totalorder 0, %s593
          %s595 = smul.addr %s589, 8
          %s596 = scalar_lea.vmem %s5, %s595
          // Predicated region
          $region45: #{wrap_ode_forward.1} parent=43 // pred_check
            %p597 = pneg %p594
          $region46: #{wrap_ode_forward.1} parent=43 // pred_check_branch
            %599 = sbr.rel (%p597) target = $region48
          $region47: #{wrap_ode_forward.1} parent=43 // pred_region
            // Predicated region
            $region49: #{wrap_ode_forward.1} parent=47 // pred_check
              _
            $region50: #{wrap_ode_forward.1} parent=47 // pred_check_branch
              %601 = sbr.rel (0) target = $region52
            $region51: #{wrap_ode_forward.1} parent=47 // pred_region
              // Predicated region
              $region71: #{wrap_ode_forward.1} parent=51 // pred_check
                _
              $region72: #{wrap_ode_forward.1} parent=51 // pred_check_branch
                %676 = sbr.rel (0) target = $region74
              $region73: #{wrap_ode_forward.1} parent=51 // pred_region
                %s677 = sdiv.u32.pop %s592, 13
                %s678 = srem.u32.pop %s592, 13
                // While loop
                $region75: #{wrap_ode_forward.1} parent=73 // loop_pre_header
                  _
                $region76: #{wrap_ode_forward.1} parent=73 // loop_header
                  %s680 = sphi 0, %s682
                  %p681 = scmp.ge.s32.totalorder %s680, %s677
                  %s685 = sphi 0, %s716
                  %s686 = sphi %s585, %s719
                  %s687 = sphi %s596, %s720
                $region77: #{wrap_ode_forward.1} parent=73 // loop_header_branch
                  %684 = sbr.rel (%p681) target = $region81
                $region78: #{wrap_ode_forward.1} parent=73 // loop_body
                  %v688 = vld [vmem:[%s686] sm:$0xff]
                  %689 = vst [vmem:[%s687] sm:$0xff] %v688
                  %v690 = vld [vmem:[%s686 + $0x8] sm:$0xff]
                  %691 = vst [vmem:[%s687 + $0x8] sm:$0xff] %v690
                  %v692 = vld [vmem:[%s686 + $0x10] sm:$0xff]
                  %693 = vst [vmem:[%s687 + $0x10] sm:$0xff] %v692
                  %v694 = vld [vmem:[%s686 + $0x18] sm:$0xff]
                  %695 = vst [vmem:[%s687 + $0x18] sm:$0xff] %v694
                  %v696 = vld [vmem:[%s686 + $0x20] sm:$0xff]
                  %697 = vst [vmem:[%s687 + $0x20] sm:$0xff] %v696
                  %v698 = vld [vmem:[%s686 + $0x28] sm:$0xff]
                  %699 = vst [vmem:[%s687 + $0x28] sm:$0xff] %v698
                  %v700 = vld [vmem:[%s686 + $0x30] sm:$0xff]
                  %701 = vst [vmem:[%s687 + $0x30] sm:$0xff] %v700
                  %v702 = vld [vmem:[%s686 + $0x38] sm:$0xff]
                  %703 = vst [vmem:[%s687 + $0x38] sm:$0xff] %v702
                  %v704 = vld [vmem:[%s686 + $0x40] sm:$0xff]
                  %705 = vst [vmem:[%s687 + $0x40] sm:$0xff] %v704
                  %v706 = vld [vmem:[%s686 + $0x48] sm:$0xff]
                  %707 = vst [vmem:[%s687 + $0x48] sm:$0xff] %v706
                  %v708 = vld [vmem:[%s686 + $0x50] sm:$0xff]
                  %709 = vst [vmem:[%s687 + $0x50] sm:$0xff] %v708
                  %v710 = vld [vmem:[%s686 + $0x58] sm:$0xff]
                  %711 = vst [vmem:[%s687 + $0x58] sm:$0xff] %v710
                  %v712 = vld [vmem:[%s686 + $0x60] sm:$0xff]
                  %713 = vst [vmem:[%s687 + $0x60] sm:$0xff] %v712
                  %s714 = sadd.s32 1, %s685
                  %p715 = scmp.ge.s32.totalorder %s714, %s677
                  %s716 = scalar_select %p715, 0, %s714
                  %s717 = smul.u32 %s716, 104
                  %s718 = smul.u32 %s716, 104
                  %s719 = scalar_lea.vmem %s585, %s717 [#allocation2]
                  %s720 = scalar_lea.vmem %s596, %s718
                $region79: #{wrap_ode_forward.1} parent=73 // loop_footer
                  %s682 = sadd.s32 %s680, 1
                $region80: #{wrap_ode_forward.1} parent=73 // loop_footer_branch
                  %679 = sbr.rel target = $region76
                $region81: #{wrap_ode_forward.1} parent=73 // loop_exit
                  _
                %s721 = sdiv.u32.pop %s592, 13
                %s722 = srem.u32.pop %s592, 13
                %s723 = smul.u32 %s721, 13
                %s724 = smul.u32 8, %s723
                %s725 = scalar_lea.vmem %s585, %s724 [#allocation2]
                %s726 = smul.u32 8, %s723
                %s727 = scalar_lea.vmem %s596, %s726
                // While loop
                $region82: #{wrap_ode_forward.1} parent=73 // loop_pre_header
                  _
                $region83: #{wrap_ode_forward.1} parent=73 // loop_header
                  %s729 = sphi 0, %s731
                  %p730 = scmp.ge.s32.totalorder %s729, %s722
                  %s734 = sphi 0, %s741
                  %s735 = sphi %s725, %s744
                  %s736 = sphi %s727, %s745
                $region84: #{wrap_ode_forward.1} parent=73 // loop_header_branch
                  %733 = sbr.rel (%p730) target = $region88
                $region85: #{wrap_ode_forward.1} parent=73 // loop_body
                  %v737 = vld [vmem:[%s735] sm:$0xff]
                  %738 = vst [vmem:[%s736] sm:$0xff] %v737
                  %s739 = sadd.s32 1, %s734
                  %p740 = scmp.ge.s32.totalorder %s739, %s722
                  %s741 = scalar_select %p740, 0, %s739
                  %s742 = smul.u32 %s741, 8
                  %s743 = smul.u32 %s741, 8
                  %s744 = scalar_lea.vmem %s725, %s742 [#allocation2]
                  %s745 = scalar_lea.vmem %s727, %s743
                $region86: #{wrap_ode_forward.1} parent=73 // loop_footer
                  %s731 = sadd.s32 %s729, 1
                $region87: #{wrap_ode_forward.1} parent=73 // loop_footer_branch
                  %728 = sbr.rel target = $region83
                $region88: #{wrap_ode_forward.1} parent=73 // loop_exit
                  _
              $region74: #{wrap_ode_forward.1} parent=51 // pred_fallthru
                _
              // Predicated region
              $region89: #{wrap_ode_forward.1} parent=51 // pred_check
                _
              $region90: #{wrap_ode_forward.1} parent=51 // pred_check_branch
                %747 = sbr.rel target = $region92
              $region91: #{wrap_ode_forward.1} parent=51 // pred_region
                _
              $region92: #{wrap_ode_forward.1} parent=51 // pred_fallthru
                _
            $region52: #{wrap_ode_forward.1} parent=47 // pred_fallthru
              _
            // Predicated region
            $region53: #{wrap_ode_forward.1} parent=47 // pred_check
              _
            $region54: #{wrap_ode_forward.1} parent=47 // pred_check_branch
              %603 = sbr.rel target = $region56
            $region55: #{wrap_ode_forward.1} parent=47 // pred_region
              %s605 = ssub.s32 256, 1
              %s606 = sdiv.u32.pop %s592, 13
              %s607 = srem.u32.pop %s592, 13
              // While loop
              $region57: #{wrap_ode_forward.1} parent=55 // loop_pre_header
                _
              $region58: #{wrap_ode_forward.1} parent=55 // loop_header
                %s609 = sphi 0, %s611
                %p610 = scmp.ge.s32.totalorder %s609, %s606
                %s614 = sphi 0, %s645
                %s615 = sphi %s585, %s648
                %s616 = sphi %s596, %s649
              $region59: #{wrap_ode_forward.1} parent=55 // loop_header_branch
                %613 = sbr.rel (%p610) target = $region63
              $region60: #{wrap_ode_forward.1} parent=55 // loop_body
                %v617 = vld [vmem:[%s615] sm:%s605]
                %618 = vst [vmem:[%s616] sm:%s605] %v617
                %v619 = vld [vmem:[%s615 + $0x8] sm:%s605]
                %620 = vst [vmem:[%s616 + $0x8] sm:%s605] %v619
                %v621 = vld [vmem:[%s615 + $0x10] sm:%s605]
                %622 = vst [vmem:[%s616 + $0x10] sm:%s605] %v621
                %v623 = vld [vmem:[%s615 + $0x18] sm:%s605]
                %624 = vst [vmem:[%s616 + $0x18] sm:%s605] %v623
                %v625 = vld [vmem:[%s615 + $0x20] sm:%s605]
                %626 = vst [vmem:[%s616 + $0x20] sm:%s605] %v625
                %v627 = vld [vmem:[%s615 + $0x28] sm:%s605]
                %628 = vst [vmem:[%s616 + $0x28] sm:%s605] %v627
                %v629 = vld [vmem:[%s615 + $0x30] sm:%s605]
                %630 = vst [vmem:[%s616 + $0x30] sm:%s605] %v629
                %v631 = vld [vmem:[%s615 + $0x38] sm:%s605]
                %632 = vst [vmem:[%s616 + $0x38] sm:%s605] %v631
                %v633 = vld [vmem:[%s615 + $0x40] sm:%s605]
                %634 = vst [vmem:[%s616 + $0x40] sm:%s605] %v633
                %v635 = vld [vmem:[%s615 + $0x48] sm:%s605]
                %636 = vst [vmem:[%s616 + $0x48] sm:%s605] %v635
                %v637 = vld [vmem:[%s615 + $0x50] sm:%s605]
                %638 = vst [vmem:[%s616 + $0x50] sm:%s605] %v637
                %v639 = vld [vmem:[%s615 + $0x58] sm:%s605]
                %640 = vst [vmem:[%s616 + $0x58] sm:%s605] %v639
                %v641 = vld [vmem:[%s615 + $0x60] sm:%s605]
                %642 = vst [vmem:[%s616 + $0x60] sm:%s605] %v641
                %s643 = sadd.s32 1, %s614
                %p644 = scmp.ge.s32.totalorder %s643, %s606
                %s645 = scalar_select %p644, 0, %s643
                %s646 = smul.u32 %s645, 104
                %s647 = smul.u32 %s645, 104
                %s648 = scalar_lea.vmem %s585, %s646 [#allocation2]
                %s649 = scalar_lea.vmem %s596, %s647
              $region61: #{wrap_ode_forward.1} parent=55 // loop_footer
                %s611 = sadd.s32 %s609, 1
              $region62: #{wrap_ode_forward.1} parent=55 // loop_footer_branch
                %608 = sbr.rel target = $region58
              $region63: #{wrap_ode_forward.1} parent=55 // loop_exit
                _
              %s650 = sdiv.u32.pop %s592, 13
              %s651 = srem.u32.pop %s592, 13
              %s652 = smul.u32 %s650, 13
              %s653 = smul.u32 8, %s652
              %s654 = scalar_lea.vmem %s585, %s653 [#allocation2]
              %s655 = smul.u32 8, %s652
              %s656 = scalar_lea.vmem %s596, %s655
              // While loop
              $region64: #{wrap_ode_forward.1} parent=55 // loop_pre_header
                _
              $region65: #{wrap_ode_forward.1} parent=55 // loop_header
                %s658 = sphi 0, %s660
                %p659 = scmp.ge.s32.totalorder %s658, %s651
                %s663 = sphi 0, %s670
                %s664 = sphi %s654, %s673
                %s665 = sphi %s656, %s674
              $region66: #{wrap_ode_forward.1} parent=55 // loop_header_branch
                %662 = sbr.rel (%p659) target = $region70
              $region67: #{wrap_ode_forward.1} parent=55 // loop_body
                %v666 = vld [vmem:[%s664] sm:%s605]
                %667 = vst [vmem:[%s665] sm:%s605] %v666
                %s668 = sadd.s32 1, %s663
                %p669 = scmp.ge.s32.totalorder %s668, %s651
                %s670 = scalar_select %p669, 0, %s668
                %s671 = smul.u32 %s670, 8
                %s672 = smul.u32 %s670, 8
                %s673 = scalar_lea.vmem %s654, %s671 [#allocation2]
                %s674 = scalar_lea.vmem %s656, %s672
              $region68: #{wrap_ode_forward.1} parent=55 // loop_footer
                %s660 = sadd.s32 %s658, 1
              $region69: #{wrap_ode_forward.1} parent=55 // loop_footer_branch
                %657 = sbr.rel target = $region65
              $region70: #{wrap_ode_forward.1} parent=55 // loop_exit
                _
            $region56: #{wrap_ode_forward.1} parent=47 // pred_fallthru
              _
          $region48: #{wrap_ode_forward.1} parent=43 // pred_fallthru
            _
          %748 = vnop
        $region44: #{wrap_ode_forward.1} parent=39 // pred_fallthru
          _
      $region40: #{wrap_ode_forward.1} parent=5 // pred_fallthru
        _
      %p749 = scmp.le.s32.totalorder 2, %s11
      // Predicated region
      $region93: #{wrap_ode_forward.1} parent=5 // pred_check
        %p750 = pneg %p749
      $region94: #{wrap_ode_forward.1} parent=5 // pred_check_branch
        %752 = sbr.rel (%p750) target = $region96
      $region95: #{wrap_ode_forward.1} parent=5 // pred_region
        %s753 = ssub.s32 %s11, 2
        // Predicated region
        $region97: #{wrap_ode_forward.1} parent=95 // pred_check
          %p754 = pneg %p150
        $region98: #{wrap_ode_forward.1} parent=95 // pred_check_branch
          %756 = sbr.rel (%p754) target = $region100
        $region99: #{wrap_ode_forward.1} parent=95 // pred_region
          %s757 = sand.u32 %s135, 1
          %s758 = sand.u32 %s135, 1
          %s759 = smul.addr %s758, 104
          %s760 = scalar_lea.vmem [#allocation2], %s759
        $region100: #{wrap_ode_forward.1} parent=95 // pred_fallthru
          _
      $region96: #{wrap_ode_forward.1} parent=5 // pred_fallthru
        _
    $region6: #{wrap_ode_forward.1} parent=1 // loop_footer
      %s15 = sadd.s32 1, %s11
    $region7: #{wrap_ode_forward.1} parent=1 // loop_footer_branch
      %10 = sbr.rel target = $region3
    $region8: #{wrap_ode_forward.1} parent=1 // loop_exit
      _

</llo_original>
